<compile_context>
chip_gen: v7x
topology: tpu7x:2x2x1
jax: 0.10.0
libtpu: 0.0.40
codegen_flags: <defaults>
</compile_context>

<pallas_src>
import numpy as np
import jax
import jax.numpy as jnp
from jax.experimental import pallas as pl
from jax.experimental.pallas import tpu as pltpu


def _conv_same_matrix(k2d, H, W):
    """Dense (HW, HW) matrix M such that M @ vec(img) == conv2d(img, k, 'same')."""
    k = np.asarray(k2d, np.float32)
    K = k.shape[0]
    pad = K // 2
    M = np.zeros((H * W, H * W), np.float32)
    for oh in range(H):
        for ow in range(W):
            for i in range(K):
                for j in range(K):
                    ih, iw = oh + i - pad, ow + j - pad
                    if 0 <= ih < H and 0 <= iw < W:
                        M[oh * W + ow, ih * W + iw] = k[i, j]
    return M


def _make_kernel(H, W, C, N, pool, classes):
    HW = H * W
    NC = N * C
    PH, PW = H // pool, W // pool
    P = PH * PW

    def kernel(x_ref, wcp_ref, b_ref, a1_ref, a2_ref, e_ref, wfc_ref, bfc_ref,
               att_ref, cls_ref):
        X = x_ref[...]                                   # (HW, N*C) f32
        Xb = X.astype(jnp.bfloat16)

        # channel pool (1x1 conv) for the whole batch: block-diagonal weight keeps
        # each sample's channel group separate.  Output has batch on lanes.
        p = jnp.dot(Xb, wcp_ref[...], preferred_element_type=jnp.float32)
        p = jnp.maximum(p + b_ref[0], 0.0)               # (HW, N)

        # attention conv1 (kxk 'same') as dense conv-matrix matmul, batched over lanes
        a = jnp.dot(a1_ref[...], p.astype(jnp.bfloat16),
                    preferred_element_type=jnp.float32)
        a = jnp.maximum(a + b_ref[1], 0.0)               # (HW, N)

        # attention conv2 + sigmoid
        a = jnp.dot(a2_ref[...], a.astype(jnp.bfloat16),
                    preferred_element_type=jnp.float32)
        a = jax.nn.sigmoid(a + b_ref[2])                 # (HW, N)

        # broadcast the per-pixel attention over channels via a 0/1 replication matmul
        ab = jnp.dot(a, e_ref[...], preferred_element_type=jnp.float32)  # (HW, N*C)
        att = X * ab
        att_ref[...] = att

        # vectorized max-pool (pool x pool, stride pool): reduce W then H;
        # lane dim (N*C) is untouched by the reshapes.
        r = jnp.max(att.reshape(H * PW, pool, NC), axis=1)       # (H*PW, N*C)
        r = jnp.max(r.reshape(PH, pool, PW, NC), axis=1)         # (PH, PW, N*C)
        pooled = r.reshape(P, NC)                                # row p = ph*PW + pw

        # single FC matmul for the whole batch: lane-concatenate the P pooled rows
        # into one (1, P*N*C) row; weight is block-diagonal over samples.
        flat = jnp.concatenate([pooled[i:i + 1, :] for i in range(P)], axis=1)
        cls = jnp.dot(flat, wfc_ref[...],
                      preferred_element_type=jnp.float32) + bfc_ref[...]
        cls_ref[...] = cls                                       # (1, N*classes)

    return kernel


def init_params(key, filters, classes):
    if filters == 32:
        ksize, pool, in_features = 7, 4, 128
    elif filters == 64:
        ksize, pool, in_features = 5, 2, 256
    elif filters == 128:
        ksize, pool, in_features = 3, 1, 512
    else:
        raise ValueError("unsupported filters")

    keys = jax.random.split(key, 8)

    def u(k, shape, fan_in):
        bound = 1.0 / np.sqrt(fan_in)
        return jax.random.uniform(k, shape, jnp.float32, -bound, bound)

    return dict(
        w_cp=u(keys[0], (filters,), filters),
        b_cp=u(keys[1], (), filters),
        k1=u(keys[2], (ksize, ksize), ksize * ksize),
        b1=u(keys[3], (), ksize * ksize),
        k2=u(keys[4], (ksize, ksize), ksize * ksize),
        b2=u(keys[5], (), ksize * ksize),
        w_fc=u(keys[6], (classes, in_features), in_features),
        b_fc=u(keys[7], (classes,), in_features),
        pool=pool,
    )


def spatial_attention_forward(x, params, classes):
    """x: (N, C, H, W) float32 (NCHW, like PyTorch). Returns (attention NCHW, class_features)."""
    N, C, H, W = x.shape
    pool = params["pool"]
    HW = H * W
    NC = N * C
    PH, PW = H // pool, W // pool
    P = PH * PW
    assert C * P == params["w_fc"].shape[1], "spatial size inconsistent with fc1 in_features"

    # ---- host-side glue: layout + parameter packing ----
    # (N,C,H,W) -> (HW, N*C): batch-major, channel-minor lane groups.
    x_lay = jnp.transpose(x, (2, 3, 0, 1)).reshape(HW, NC).astype(jnp.float32)

    eyeN = np.eye(N, dtype=np.float32)
    # block-diagonal 1x1-conv weight: (N*C, N)
    wcp_bd = np.kron(eyeN, np.asarray(params["w_cp"], np.float32).reshape(C, 1))
    # channel-broadcast replication matrix: (N, N*C)
    E = np.kron(eyeN, np.ones((1, C), np.float32))
    # dense 'same' conv matrices: (HW, HW)
    A1 = _conv_same_matrix(params["k1"], H, W)
    A2 = _conv_same_matrix(params["k2"], H, W)
    # FC weight: torch flatten order of pooled features is (c, ph, pw) -> idx c*P + p.
    # Build block-diagonal (P*N*C, N*classes) weight matching the in-kernel flatten.
    wfc3 = np.asarray(params["w_fc"], np.float32).reshape(classes, C, P)      # [k, c, p]
    base = np.transpose(wfc3, (2, 1, 0))                                      # (P, C, classes)
    wfc_blk = np.stack([np.kron(eyeN, base[p]) for p in range(P)], axis=0)
    wfc_blk = wfc_blk.reshape(P * NC, N * classes)
    bfc = np.tile(np.asarray(params["b_fc"], np.float32), N).reshape(1, N * classes)

    biases = jnp.stack([params["b_cp"], params["b1"], params["b2"]]).astype(jnp.float32)

    kernel = _make_kernel(H, W, C, N, pool, classes)

    att_lay, cls = pl.pallas_call(
        kernel,
        out_shape=(
            jax.ShapeDtypeStruct((HW, NC), jnp.float32),
            jax.ShapeDtypeStruct((1, N * classes), jnp.float32),
        ),
        in_specs=[
            pl.BlockSpec(memory_space=pltpu.MemorySpace.VMEM),   # x (HW, N*C)
            pl.BlockSpec(memory_space=pltpu.MemorySpace.VMEM),   # channel-pool block-diag (bf16)
            pl.BlockSpec(memory_space=pltpu.MemorySpace.SMEM),   # biases (3,)
            pl.BlockSpec(memory_space=pltpu.MemorySpace.VMEM),   # conv1 matrix (bf16)
            pl.BlockSpec(memory_space=pltpu.MemorySpace.VMEM),   # conv2 matrix (bf16)
            pl.BlockSpec(memory_space=pltpu.MemorySpace.VMEM),   # replication matrix E
            pl.BlockSpec(memory_space=pltpu.MemorySpace.VMEM),   # FC block weight
            pl.BlockSpec(memory_space=pltpu.MemorySpace.VMEM),   # FC bias row
        ],
        out_specs=(
            pl.BlockSpec(memory_space=pltpu.MemorySpace.VMEM),
            pl.BlockSpec(memory_space=pltpu.MemorySpace.VMEM),
        ),
    )(x_lay,
      jnp.asarray(wcp_bd, jnp.bfloat16),
      biases,
      jnp.asarray(A1, jnp.bfloat16),
      jnp.asarray(A2, jnp.bfloat16),
      jnp.asarray(E, jnp.float32),
      jnp.asarray(wfc_blk, jnp.float32),
      jnp.asarray(bfc, jnp.float32))

    attention = att_lay.reshape(H, W, N, C).transpose(2, 3, 0, 1)   # back to NCHW
    class_features = cls.reshape(N, classes)
    return attention, class_features


def reference_forward(x, params, classes):
    """Pure-JAX (non-Pallas) reference matching the PyTorch module."""
    N, C, H, W = x.shape
    dn = ("NCHW", "OIHW", "NCHW")
    wcp = params["w_cp"].reshape(1, C, 1, 1)
    k1 = params["k1"].reshape(1, 1, *params["k1"].shape)
    k2 = params["k2"].reshape(1, 1, *params["k2"].shape)

    p = jax.lax.conv_general_dilated(x, wcp, (1, 1), "VALID", dimension_numbers=dn) + params["b_cp"]
    p = jax.nn.relu(p)
    a = jax.lax.conv_general_dilated(p, k1, (1, 1), "SAME", dimension_numbers=dn) + params["b1"]
    a = jax.nn.relu(a)
    a = jax.lax.conv_general_dilated(a, k2, (1, 1), "SAME", dimension_numbers=dn) + params["b2"]
    a = jax.nn.sigmoid(a)
    att = x * a
    pool = params["pool"]
    pooled = jax.lax.reduce_window(att, -jnp.inf, jax.lax.max,
                                   (1, 1, pool, pool), (1, 1, pool, pool), "VALID")
    flat = pooled.reshape(N, -1)
    cls = flat @ params["w_fc"].T + params["b_fc"]
    return att, cls


if __name__ == "__main__":
    filters, classes = 32, 4
    # filters=32 -> MaxPool(4,4), fc in_features=128 = 32*(8/4)*(8/4)
    # N=4 makes N*C = 128 so every in-kernel lane dimension is fully dense.
    N, H, W = 4, 8, 8

    key = jax.random.PRNGKey(0)
    kx, kp = jax.random.split(key)
    x = jax.random.normal(kx, (N, filters, H, W), jnp.float32)
    params = init_params(kp, filters, classes)

    attention, class_features = spatial_attention_forward(x, params, classes)
    jax.block_until_ready((attention, class_features))

    att_ref, cls_ref = reference_forward(x, params, classes)
    assert attention.shape == (N, filters, H, W)
    assert class_features.shape == (N, classes)
    np.testing.assert_allclose(np.asarray(attention), np.asarray(att_ref), rtol=3e-2, atol=3e-2)
    np.testing.assert_allclose(np.asarray(class_features), np.asarray(cls_ref), rtol=3e-2, atol=3e-2)

    print("KERNEL_OK")
</pallas_src>

<mosaic_0001>
module attributes {stable_mosaic.version = 11 : i64} {
  func.func @kernel(%arg0: memref<64x128xf32, #tpu.memory_space<vmem>>, %arg1: memref<128x4xbf16, #tpu.memory_space<vmem>>, %arg2: memref<3xf32, #tpu.memory_space<smem>>, %arg3: memref<64x64xbf16, #tpu.memory_space<vmem>>, %arg4: memref<64x64xbf16, #tpu.memory_space<vmem>>, %arg5: memref<4x128xf32, #tpu.memory_space<vmem>>, %arg6: memref<512x16xf32, #tpu.memory_space<vmem>>, %arg7: memref<1x16xf32, #tpu.memory_space<vmem>>, %arg8: memref<64x128xf32, #tpu.memory_space<vmem>>, %arg9: memref<1x16xf32, #tpu.memory_space<vmem>>) attributes {dimension_semantics = [], scalar_prefetch = 0 : i64, scratch_operands = 0 : i64, tpu.core_type = #tpu.core_type<tc>} {
    %c0 = arith.constant 0 : index
    %c0_0 = arith.constant 0 : index
    %0 = vector.load %arg0[%c0, %c0_0] : memref<64x128xf32, #tpu.memory_space<vmem>>, vector<64x128xf32>
    %1 = arith.truncf %0 : vector<64x128xf32> to vector<64x128xbf16>
    %c0_1 = arith.constant 0 : index
    %c0_2 = arith.constant 0 : index
    %2 = vector.load %arg1[%c0_1, %c0_2] : memref<128x4xbf16, #tpu.memory_space<vmem>>, vector<128x4xbf16>
    %cst = arith.constant dense<0.000000e+00> : vector<64x4xf32>
    %3 = tpu.matmul %1, %2, %cst {dimension_numbers = #tpu.dot_dimension_numbers<[1], [0], [0], [1], [0, 0, 1, 1], [], []>} : vector<64x128xbf16>, vector<128x4xbf16>, vector<64x4xf32> -> vector<64x4xf32>
    %c0_3 = arith.constant 0 : index
    %4 = memref.load %arg2[%c0_3] : memref<3xf32, #tpu.memory_space<smem>>
    %5 = vector.broadcast %4 : f32 to vector<64x4xf32>
    %6 = arith.addf %3, %5 : vector<64x4xf32>
    %cst_4 = arith.constant 0.000000e+00 : f32
    %7 = vector.broadcast %cst_4 : f32 to vector<64x4xf32>
    %8 = arith.maximumf %6, %7 : vector<64x4xf32>
    %c0_5 = arith.constant 0 : index
    %c0_6 = arith.constant 0 : index
    %9 = vector.load %arg3[%c0_5, %c0_6] : memref<64x64xbf16, #tpu.memory_space<vmem>>, vector<64x64xbf16>
    %10 = arith.truncf %8 : vector<64x4xf32> to vector<64x4xbf16>
    %cst_7 = arith.constant dense<0.000000e+00> : vector<64x4xf32>
    %11 = tpu.matmul %9, %10, %cst_7 {dimension_numbers = #tpu.dot_dimension_numbers<[1], [0], [0], [1], [0, 0, 1, 1], [], []>} : vector<64x64xbf16>, vector<64x4xbf16>, vector<64x4xf32> -> vector<64x4xf32>
    %c1 = arith.constant 1 : index
    %12 = memref.load %arg2[%c1] : memref<3xf32, #tpu.memory_space<smem>>
    %13 = vector.broadcast %12 : f32 to vector<64x4xf32>
    %14 = arith.addf %11, %13 : vector<64x4xf32>
    %cst_8 = arith.constant 0.000000e+00 : f32
    %15 = vector.broadcast %cst_8 : f32 to vector<64x4xf32>
    %16 = arith.maximumf %14, %15 : vector<64x4xf32>
    %c0_9 = arith.constant 0 : index
    %c0_10 = arith.constant 0 : index
    %17 = vector.load %arg4[%c0_9, %c0_10] : memref<64x64xbf16, #tpu.memory_space<vmem>>, vector<64x64xbf16>
    %18 = arith.truncf %16 : vector<64x4xf32> to vector<64x4xbf16>
    %cst_11 = arith.constant dense<0.000000e+00> : vector<64x4xf32>
    %19 = tpu.matmul %17, %18, %cst_11 {dimension_numbers = #tpu.dot_dimension_numbers<[1], [0], [0], [1], [0, 0, 1, 1], [], []>} : vector<64x64xbf16>, vector<64x4xbf16>, vector<64x4xf32> -> vector<64x4xf32>
    %c2 = arith.constant 2 : index
    %20 = memref.load %arg2[%c2] : memref<3xf32, #tpu.memory_space<smem>>
    %21 = vector.broadcast %20 : f32 to vector<64x4xf32>
    %22 = arith.addf %19, %21 : vector<64x4xf32>
    %23 = arith.negf %22 : vector<64x4xf32>
    %24 = math.exp %23 : vector<64x4xf32>
    %cst_12 = arith.constant 1.000000e+00 : f32
    %25 = vector.broadcast %cst_12 : f32 to vector<64x4xf32>
    %26 = arith.addf %25, %24 : vector<64x4xf32>
    %27 = arith.divf %25, %26 : vector<64x4xf32>
    %c0_13 = arith.constant 0 : index
    %c0_14 = arith.constant 0 : index
    %28 = vector.load %arg5[%c0_13, %c0_14] : memref<4x128xf32, #tpu.memory_space<vmem>>, vector<4x128xf32>
    %cst_15 = arith.constant dense<0.000000e+00> : vector<64x128xf32>
    %29 = tpu.matmul %27, %28, %cst_15 {dimension_numbers = #tpu.dot_dimension_numbers<[1], [0], [0], [1], [0, 0, 1, 1], [], []>} : vector<64x4xf32>, vector<4x128xf32>, vector<64x128xf32> -> vector<64x128xf32>
    %30 = arith.mulf %0, %29 : vector<64x128xf32>
    %c0_16 = arith.constant 0 : index
    %c0_17 = arith.constant 0 : index
    %31 = vector.load %arg8[%c0_16, %c0_17] : memref<64x128xf32, #tpu.memory_space<vmem>>, vector<64x128xf32>
    tpu.vector_store %arg8[%c0_16, %c0_17], %30 {strides = array<i32>} : memref<64x128xf32, #tpu.memory_space<vmem>>, vector<64x128xf32>,
    %32 = vector.shape_cast %30 : vector<64x128xf32> to vector<16x4x128xf32>
    %cst_18 = arith.constant dense<0xFF800000> : vector<16x128xf32>
    %33 = vector.multi_reduction <maximumf>, %32, %cst_18 [1] : vector<16x4x128xf32> to vector<16x128xf32>
    %34 = vector.shape_cast %33 : vector<16x128xf32> to vector<2x4x2x128xf32>
    %cst_19 = arith.constant dense<0xFF800000> : vector<2x2x128xf32>
    %35 = vector.multi_reduction <maximumf>, %34, %cst_19 [1] : vector<2x4x2x128xf32> to vector<2x2x128xf32>
    %36 = vector.shape_cast %35 : vector<2x2x128xf32> to vector<4x128xf32>
    %37 = vector.extract_strided_slice %36 {offsets = [0, 0], sizes = [1, 128], strides = [1, 1]} : vector<4x128xf32> to vector<1x128xf32>
    %38 = vector.extract_strided_slice %36 {offsets = [1, 0], sizes = [1, 128], strides = [1, 1]} : vector<4x128xf32> to vector<1x128xf32>
    %39 = vector.extract_strided_slice %36 {offsets = [2, 0], sizes = [1, 128], strides = [1, 1]} : vector<4x128xf32> to vector<1x128xf32>
    %40 = vector.extract_strided_slice %36 {offsets = [3, 0], sizes = [1, 128], strides = [1, 1]} : vector<4x128xf32> to vector<1x128xf32>
    %41 = tpu.concatenate %37, %38, %39, %40 in 1 : vector<1x128xf32>, vector<1x128xf32>, vector<1x128xf32>, vector<1x128xf32> -> vector<1x512xf32>
    %c0_20 = arith.constant 0 : index
    %c0_21 = arith.constant 0 : index
    %42 = vector.load %arg6[%c0_20, %c0_21] : memref<512x16xf32, #tpu.memory_space<vmem>>, vector<512x16xf32>
    %cst_22 = arith.constant dense<0.000000e+00> : vector<1x16xf32>
    %43 = tpu.matmul %41, %42, %cst_22 {dimension_numbers = #tpu.dot_dimension_numbers<[1], [0], [0], [1], [0, 0, 1, 1], [], []>} : vector<1x512xf32>, vector<512x16xf32>, vector<1x16xf32> -> vector<1x16xf32>
    %c0_23 = arith.constant 0 : index
    %c0_24 = arith.constant 0 : index
    %44 = vector.load %arg7[%c0_23, %c0_24] : memref<1x16xf32, #tpu.memory_space<vmem>>, vector<1x16xf32>
    %45 = arith.addf %43, %44 : vector<1x16xf32>
    %c0_25 = arith.constant 0 : index
    %c0_26 = arith.constant 0 : index
    %46 = vector.load %arg9[%c0_25, %c0_26] : memref<1x16xf32, #tpu.memory_space<vmem>>, vector<1x16xf32>
    tpu.vector_store %arg9[%c0_25, %c0_26], %45 {strides = array<i32>} : memref<1x16xf32, #tpu.memory_space<vmem>>, vector<1x16xf32>,
    return
  }
}

</mosaic_0001>

<llo_original>
// kernel: tpu_custom_call.1
$region0: #{tpu_custom_call.1}
  #allocation0 [shape = 'u32[]', space=smem, size = 0x4, offset = 0x4, fixed_abs, tag = 'smem constant byte address 0x4 - core index']
  #allocation1 [shape = 'u32[144,128]{1,0:T(1,128)}', space=vmem, size = 0x12000, scoped, tag = 'internal scratch']
  %s0 = inlined_call_operand.vmem [shape: f32[64,128], index: 0, kind: input, shape index: {}]
  %s1 = inlined_call_operand.vmem [shape: bf16[128,4], index: 1, kind: input, shape index: {}]
  %s2 = inlined_call_operand.vmem [shape: f32[3], index: 2, kind: input, shape index: {}]
  %s3 = inlined_call_operand.vmem [shape: bf16[64,64], index: 3, kind: input, shape index: {}]
  %s4 = inlined_call_operand.vmem [shape: bf16[64,64], index: 4, kind: input, shape index: {}]
  %s5 = inlined_call_operand.vmem [shape: f32[4,128], index: 5, kind: input, shape index: {}]
  %s6 = inlined_call_operand.vmem [shape: f32[512,16], index: 6, kind: input, shape index: {}]
  %s7 = inlined_call_operand.vmem [shape: f32[1,16], index: 7, kind: input, shape index: {}]
  %s8 = inlined_call_operand.hbm [shape: f32[64,128], index: 8, kind: output, shape index: {0}]
  %s9 = inlined_call_operand.hbm [shape: f32[1,16], index: 9, kind: output, shape index: {1}]
  %10 = xla_tuple %s8, %s9
  %s11 = sld [smem:[#allocation0]]
  $region54: #{tpu_custom_call.1} parent=0
    _
  %s13 = ssub.s32 1, %s11
  %s14 = scalar_select 0, %s13, %s11
  $region1: #{tpu_custom_call.1} parent=0
    #allocation2 [shape = 'u8[512]{0}', space=smem, size = 0x200, scoped, tag = 'input window, operand 2, single buffered']
    #allocation3 [shape = 's32[1]{0}', space=sflag, size = 0x4, scoped, tag = 'scoped memory for tpu_custom_call.1']
    #allocation4 [shape = 's32[1]{0}', space=sflag, size = 0x4, scoped, tag = 'scoped memory for tpu_custom_call.1']
    #allocation5 [shape = 'u8[32768]{0}', space=vmem, size = 0x8000, scoped, tag = 'output window, operand 0, single buffered']
    #allocation6 [shape = 'u8[512]{0}', space=vmem, size = 0x400, scoped, tag = 'output window, operand 1, single buffered']
    #allocation7 [shape = 's32[1]{0}', space=sflag, size = 0x4, scoped, tag = 'scoped memory for tpu_custom_call.1']
    %15 = vsyncpa [#allocation4], 0
    %16 = vsyncpa [#allocation3], 0
    %17 = vsyncpa [#allocation7], 0
    // Predicated region
    $region2: #{tpu_custom_call.1} parent=1 // pred_check
      _
    $region3: #{tpu_custom_call.1} parent=1 // pred_check_branch
      %19 = sbr.rel (0) target = $region5
    $region4: #{tpu_custom_call.1} parent=1 // pred_region
      _
    $region5: #{tpu_custom_call.1} parent=1 // pred_fallthru
      _
    // Predicated region
    $region6: #{tpu_custom_call.1} parent=1 // pred_check
      _
    $region7: #{tpu_custom_call.1} parent=1 // pred_check_branch
      %21 = sbr.rel (0) target = $region9
    $region8: #{tpu_custom_call.1} parent=1 // pred_region
      _
    $region9: #{tpu_custom_call.1} parent=1 // pred_fallthru
      _
    // Predicated region
    $region10: #{tpu_custom_call.1} parent=1 // pred_check
      _
    $region11: #{tpu_custom_call.1} parent=1 // pred_check_branch
      %23 = sbr.rel (0) target = $region13
    $region12: #{tpu_custom_call.1} parent=1 // pred_region
      %s25 = ssub.s32 16, 16
      %26 = vsyncadd [#allocation4], %s25
      %s28 = sshll.u32 %s2, 4
      %s29 = int_to_ptr.vmem [resolvable:$true] %s28
      %31 = dma.vmem_to_smem %s29, 16, [#allocation2], [#allocation4]
    $region13: #{tpu_custom_call.1} parent=1 // pred_fallthru
      _
    // Predicated region
    $region14: #{tpu_custom_call.1} parent=1 // pred_check
      _
    $region15: #{tpu_custom_call.1} parent=1 // pred_check_branch
      %33 = sbr.rel (0) target = $region17
    $region16: #{tpu_custom_call.1} parent=1 // pred_region
      _
    $region17: #{tpu_custom_call.1} parent=1 // pred_fallthru
      _
    // Predicated region
    $region18: #{tpu_custom_call.1} parent=1 // pred_check
      _
    $region19: #{tpu_custom_call.1} parent=1 // pred_check_branch
      %35 = sbr.rel (0) target = $region21
    $region20: #{tpu_custom_call.1} parent=1 // pred_region
      _
    $region21: #{tpu_custom_call.1} parent=1 // pred_fallthru
      _
    // Predicated region
    $region22: #{tpu_custom_call.1} parent=1 // pred_check
      _
    $region23: #{tpu_custom_call.1} parent=1 // pred_check_branch
      %37 = sbr.rel (0) target = $region25
    $region24: #{tpu_custom_call.1} parent=1 // pred_region
      _
    $region25: #{tpu_custom_call.1} parent=1 // pred_fallthru
      _
    // Predicated region
    $region26: #{tpu_custom_call.1} parent=1 // pred_check
      _
    $region27: #{tpu_custom_call.1} parent=1 // pred_check_branch
      %39 = sbr.rel (0) target = $region29
    $region28: #{tpu_custom_call.1} parent=1 // pred_region
      _
    $region29: #{tpu_custom_call.1} parent=1 // pred_fallthru
      _
    // Predicated region
    $region30: #{tpu_custom_call.1} parent=1 // pred_check
      _
    $region31: #{tpu_custom_call.1} parent=1 // pred_check_branch
      %41 = sbr.rel (0) target = $region33
    $region32: #{tpu_custom_call.1} parent=1 // pred_region
      _
    $region33: #{tpu_custom_call.1} parent=1 // pred_fallthru
      _
    // Predicated region
    $region34: #{tpu_custom_call.1} parent=1 // pred_check
      _
    $region35: #{tpu_custom_call.1} parent=1 // pred_check_branch
      %43 = sbr.rel (0) target = $region37
    $region36: #{tpu_custom_call.1} parent=1 // pred_region
      %44 = dma.done [#allocation4], 16
    $region37: #{tpu_custom_call.1} parent=1 // pred_fallthru
      _
    %45 = sfence
    %v47 = vld [vmem:[%s0] sm:$0xff]
    %v48 = vld [vmem:[%s0 + $0x8] sm:$0xff]
    %v49 = vld [vmem:[%s0 + $0x10] sm:$0xff]
    %v50 = vld [vmem:[%s0 + $0x18] sm:$0xff]
    %v51 = vld [vmem:[%s0 + $0x20] sm:$0xff]
    %v52 = vld [vmem:[%s0 + $0x28] sm:$0xff]
    %v53 = vld [vmem:[%s0 + $0x30] sm:$0xff]
    %v54 = vld [vmem:[%s0 + $0x38] sm:$0xff]
    %v55 = vpack.c.bf16 %v48, %v47
    %v56 = vpack.c.bf16 %v50, %v49
    %v57 = vpack.c.bf16 %v52, %v51
    %v58 = vpack.c.bf16 %v54, %v53
    %v59 = vld [vmem:[%s1] sm:$0xf]
    %v60 = vld [vmem:[%s1 + $0x4] sm:$0xf]
    %v61 = vld [vmem:[%s1 + $0x8] sm:$0xf]
    %v62 = vld [vmem:[%s1 + $0xc] sm:$0xf]
    %v63 = vld [vmem:[%s1 + $0x10] sm:$0xf]
    %v64 = vld [vmem:[%s1 + $0x14] sm:$0xf]
    %v65 = vld [vmem:[%s1 + $0x18] sm:$0xf]
    %v66 = vld [vmem:[%s1 + $0x1c] sm:$0xf]
    %v67 = vld [vmem:[%s1 + $0x20] sm:$0xf]
    %v68 = vld [vmem:[%s1 + $0x24] sm:$0xf]
    %v69 = vld [vmem:[%s1 + $0x28] sm:$0xf]
    %v70 = vld [vmem:[%s1 + $0x2c] sm:$0xf]
    %v71 = vld [vmem:[%s1 + $0x30] sm:$0xf]
    %v72 = vld [vmem:[%s1 + $0x34] sm:$0xf]
    %v73 = vld [vmem:[%s1 + $0x38] sm:$0xf]
    %v74 = vld [vmem:[%s1 + $0x3c] sm:$0xf]
    %s75 = sld [smem:[#allocation2]]
    %v76 = vstv %s75
    %v93 = vunpack.c.l.b16 %v59
    %v94 = vunpack.c.l.b16 %v60
    %v95 = vunpack.c.l.b16 %v61
    %v96 = vunpack.c.l.b16 %v62
    %v97 = vunpack.c.l.b16 %v63
    %v98 = vunpack.c.l.b16 %v64
    %v99 = vunpack.c.l.b16 %v65
    %v100 = vunpack.c.l.b16 %v66
    %v101 = vunpack.c.l.b16 %v67
    %v102 = vunpack.c.l.b16 %v68
    %v103 = vunpack.c.l.b16 %v69
    %v104 = vunpack.c.l.b16 %v70
    %v105 = vunpack.c.l.b16 %v71
    %v106 = vunpack.c.l.b16 %v72
    %v107 = vunpack.c.l.b16 %v73
    %v108 = vunpack.c.l.b16 %v74
    %v109 = vpack.c.b16 %v94, %v93
    %v110 = vpack.c.b16 %v96, %v95
    %v111 = vpack.c.b16 %v98, %v97
    %v112 = vpack.c.b16 %v100, %v99
    %v113 = vpack.c.b16 %v102, %v101
    %v114 = vpack.c.b16 %v104, %v103
    %v115 = vpack.c.b16 %v106, %v105
    %v116 = vpack.c.b16 %v108, %v107
    %125 = vmatprep.subr.bf16.mxu0 0
    %126 = vmatpush1.bf16.msra.mxu0 %v109
    %127 = vmatprep.subr.bf16.mxu0 0
    %128 = vmatpush1.bf16.msra.mxu0 %v110
    %129 = vmatprep.subr.bf16.mxu0 0
    %130 = vmatpush1.bf16.msra.mxu0 %v111
    %131 = vmatprep.subr.bf16.mxu0 0
    %132 = vmatpush1.bf16.msra.mxu0 %v112
    %133 = vmatprep.subr.bf16.mxu0 0
    %134 = vmatpush1.bf16.msra.mxu0 %v113
    %135 = vmatprep.subr.bf16.mxu0 0
    %136 = vmatpush1.bf16.msra.mxu0 %v114
    %137 = vmatprep.subr.bf16.mxu0 0
    %138 = vmatpush1.bf16.msra.mxu0 %v115
    %139 = vmatprep.subr.bf16.mxu0 0
    %140 = vmatpush1.bf16.msra.mxu0 %v116
    %141 = vmatprep.subr.bf16.mxu0 0
    %142 = vmatpush1.bf16.msra.mxu0 0
    %143 = vmatprep.subr.bf16.mxu0 0
    %144 = vmatpush1.bf16.msra.mxu0 0
    %145 = vmatprep.subr.bf16.mxu0 0
    %146 = vmatpush1.bf16.msra.mxu0 0
    %147 = vmatprep.subr.bf16.mxu0 0
    %148 = vmatpush1.bf16.msra.mxu0 0
    %149 = vmatprep.subr.bf16.mxu0 0
    %150 = vmatpush1.bf16.msra.mxu0 0
    %151 = vmatprep.subr.bf16.mxu0 0
    %152 = vmatpush1.bf16.msra.mxu0 0
    %153 = vmatprep.subr.bf16.mxu0 0
    %154 = vmatpush1.bf16.msra.mxu0 0
    %155 = vmatprep.subr.bf16.mxu0 0
    %156 = vmatpush1.bf16.msra.mxu0 0
    %157 = vmatprep.mubr.bf16.mxu0 0
    %158 = vmatmul.mubr.bf16.gmra.mrb[0].mxu0 %v55
    %v159 = vpop.f32.mrb[0].mxu0
    %v160 = vadd.f32 %v76, %v159
    %v161 = vpop.f32.mrb[0].mxu0
    %v162 = vpop.f32.mrb[0].mxu0
    %v163 = vadd.f32 %v76, %v162
    %v164 = vpop.f32.mrb[0].mxu0
    %165 = vmatprep.mubr.bf16.mxu0 0
    %166 = vmatmul.mubr.bf16.gmra.mrb[0].mxu0 %v56
    %v167 = vpop.f32.mrb[0].mxu0
    %v168 = vadd.f32 %v76, %v167
    %v169 = vpop.f32.mrb[0].mxu0
    %v170 = vpop.f32.mrb[0].mxu0
    %v171 = vadd.f32 %v76, %v170
    %v172 = vpop.f32.mrb[0].mxu0
    %173 = vmatprep.mubr.bf16.mxu0 0
    %174 = vmatmul.mubr.bf16.gmra.mrb[0].mxu0 %v57
    %v175 = vpop.f32.mrb[0].mxu0
    %v176 = vadd.f32 %v76, %v175
    %v177 = vpop.f32.mrb[0].mxu0
    %v178 = vpop.f32.mrb[0].mxu0
    %v179 = vadd.f32 %v76, %v178
    %v180 = vpop.f32.mrb[0].mxu0
    %181 = vmatprep.mubr.bf16.mxu0 0
    %182 = vmatmul.mubr.bf16.gmra.mrb[0].mxu0 %v58
    %v183 = vpop.f32.mrb[0].mxu0
    %v184 = vadd.f32 %v76, %v183
    %v185 = vpop.f32.mrb[0].mxu0
    %v186 = vpop.f32.mrb[0].mxu0
    %v187 = vadd.f32 %v76, %v186
    %v188 = vpop.f32.mrb[0].mxu0
    %189 = vdwg.mxu0
    %v190 = vmax.f32 %v160, 0.0
    %v191 = vmax.f32 %v163, 0.0
    %v192 = vmax.f32 %v168, 0.0
    %v193 = vmax.f32 %v171, 0.0
    %v194 = vmax.f32 %v176, 0.0
    %v195 = vmax.f32 %v179, 0.0
    %v196 = vmax.f32 %v184, 0.0
    %v197 = vmax.f32 %v187, 0.0
    %v198 = vld [vmem:[%s3] sm:$0xf]
    %v199 = vld [vmem:[%s3 + $0x4] sm:$0xf]
    %v200 = vld [vmem:[%s3 + $0x8] sm:$0xf]
    %v201 = vld [vmem:[%s3 + $0xc] sm:$0xf]
    %v202 = vld [vmem:[%s3 + $0x10] sm:$0xf]
    %v203 = vld [vmem:[%s3 + $0x14] sm:$0xf]
    %v204 = vld [vmem:[%s3 + $0x18] sm:$0xf]
    %v205 = vld [vmem:[%s3 + $0x1c] sm:$0xf]
    %v206 = vpack.c.bf16 %v191, %v190
    %v207 = vpack.c.bf16 %v193, %v192
    %v208 = vpack.c.bf16 %v195, %v194
    %v209 = vpack.c.bf16 %v197, %v196
    %s210 = sld [smem:[#allocation2 + $0x1]]
    %v211 = vstv %s210
    %v220 = vunpack.c.l.b16 %v198
    %v221 = vunpack.c.l.b16 %v199
    %v222 = vunpack.c.l.b16 %v200
    %v223 = vunpack.c.l.b16 %v201
    %v224 = vunpack.c.l.b16 %v202
    %v225 = vunpack.c.l.b16 %v203
    %v226 = vunpack.c.l.b16 %v204
    %v227 = vunpack.c.l.b16 %v205
    %v228 = vpack.c.b16 %v221, %v220
    %v229 = vpack.c.b16 %v223, %v222
    %v230 = vpack.c.b16 %v225, %v224
    %v231 = vpack.c.b16 %v227, %v226
    %vm232 = vcmask 523264
    %v234 = vsel %vm232, %v228, 0
    %v237 = vsel %vm232, %v229, 0
    %v240 = vsel %vm232, %v230, 0
    %v243 = vsel %vm232, %v231, 0
    %245 = vmatprep.subr.bf16.mxu0 0
    %246 = vmatpush1.bf16.msra.mxu0 %v206
    %247 = vmatprep.subr.bf16.mxu0 0
    %248 = vmatpush1.bf16.msra.mxu0 %v207
    %249 = vmatprep.subr.bf16.mxu0 0
    %250 = vmatpush1.bf16.msra.mxu0 %v208
    %251 = vmatprep.subr.bf16.mxu0 0
    %252 = vmatpush1.bf16.msra.mxu0 %v209
    %253 = vmatprep.subr.bf16.mxu0 0
    %254 = vmatpush1.bf16.msra.mxu0 0
    %255 = vmatprep.subr.bf16.mxu0 0
    %256 = vmatpush1.bf16.msra.mxu0 0
    %257 = vmatprep.subr.bf16.mxu0 0
    %258 = vmatpush1.bf16.msra.mxu0 0
    %259 = vmatprep.subr.bf16.mxu0 0
    %260 = vmatpush1.bf16.msra.mxu0 0
    %261 = vmatprep.subr.bf16.mxu0 0
    %262 = vmatpush1.bf16.msra.mxu0 0
    %263 = vmatprep.subr.bf16.mxu0 0
    %264 = vmatpush1.bf16.msra.mxu0 0
    %265 = vmatprep.subr.bf16.mxu0 0
    %266 = vmatpush1.bf16.msra.mxu0 0
    %267 = vmatprep.subr.bf16.mxu0 0
    %268 = vmatpush1.bf16.msra.mxu0 0
    %269 = vmatprep.subr.bf16.mxu0 0
    %270 = vmatpush1.bf16.msra.mxu0 0
    %271 = vmatprep.subr.bf16.mxu0 0
    %272 = vmatpush1.bf16.msra.mxu0 0
    %273 = vmatprep.subr.bf16.mxu0 0
    %274 = vmatpush1.bf16.msra.mxu0 0
    %275 = vmatprep.subr.bf16.mxu0 0
    %276 = vmatpush1.bf16.msra.mxu0 0
    %277 = vmatprep.mubr.bf16.mxu0 0
    %278 = vmatmul.mubr.bf16.gmra.mrb[0].mxu0 %v234
    %v279 = vpop.f32.mrb[0].mxu0
    %v280 = vadd.f32 %v211, %v279
    %v281 = vpop.f32.mrb[0].mxu0
    %v282 = vpop.f32.mrb[0].mxu0
    %v283 = vadd.f32 %v211, %v282
    %v284 = vpop.f32.mrb[0].mxu0
    %285 = vmatprep.mubr.bf16.mxu0 0
    %286 = vmatmul.mubr.bf16.gmra.mrb[0].mxu0 %v237
    %v287 = vpop.f32.mrb[0].mxu0
    %v288 = vadd.f32 %v211, %v287
    %v289 = vpop.f32.mrb[0].mxu0
    %v290 = vpop.f32.mrb[0].mxu0
    %v291 = vadd.f32 %v211, %v290
    %v292 = vpop.f32.mrb[0].mxu0
    %293 = vmatprep.mubr.bf16.mxu0 0
    %294 = vmatmul.mubr.bf16.gmra.mrb[0].mxu0 %v240
    %v295 = vpop.f32.mrb[0].mxu0
    %v296 = vadd.f32 %v211, %v295
    %v297 = vpop.f32.mrb[0].mxu0
    %v298 = vpop.f32.mrb[0].mxu0
    %v299 = vadd.f32 %v211, %v298
    %v300 = vpop.f32.mrb[0].mxu0
    %301 = vmatprep.mubr.bf16.mxu0 0
    %302 = vmatmul.mubr.bf16.gmra.mrb[0].mxu0 %v243
    %v303 = vpop.f32.mrb[0].mxu0
    %v304 = vadd.f32 %v211, %v303
    %v305 = vpop.f32.mrb[0].mxu0
    %v306 = vpop.f32.mrb[0].mxu0
    %v307 = vadd.f32 %v211, %v306
    %v308 = vpop.f32.mrb[0].mxu0
    %309 = vdwg.mxu0
    %v310 = vmax.f32 %v280, 0.0
    %v311 = vmax.f32 %v283, 0.0
    %v312 = vmax.f32 %v288, 0.0
    %v313 = vmax.f32 %v291, 0.0
    %v314 = vmax.f32 %v296, 0.0
    %v315 = vmax.f32 %v299, 0.0
    %v316 = vmax.f32 %v304, 0.0
    %v317 = vmax.f32 %v307, 0.0
    %v318 = vld [vmem:[%s4] sm:$0xf]
    %v319 = vld [vmem:[%s4 + $0x4] sm:$0xf]
    %v320 = vld [vmem:[%s4 + $0x8] sm:$0xf]
    %v321 = vld [vmem:[%s4 + $0xc] sm:$0xf]
    %v322 = vld [vmem:[%s4 + $0x10] sm:$0xf]
    %v323 = vld [vmem:[%s4 + $0x14] sm:$0xf]
    %v324 = vld [vmem:[%s4 + $0x18] sm:$0xf]
    %v325 = vld [vmem:[%s4 + $0x1c] sm:$0xf]
    %v326 = vpack.c.bf16 %v311, %v310
    %v327 = vpack.c.bf16 %v313, %v312
    %v328 = vpack.c.bf16 %v315, %v314
    %v329 = vpack.c.bf16 %v317, %v316
    %s330 = sld [smem:[#allocation2 + $0x2]]
    %v331 = vstv %s330
    %v340 = vunpack.c.l.b16 %v318
    %v341 = vunpack.c.l.b16 %v319
    %v342 = vunpack.c.l.b16 %v320
    %v343 = vunpack.c.l.b16 %v321
    %v344 = vunpack.c.l.b16 %v322
    %v345 = vunpack.c.l.b16 %v323
    %v346 = vunpack.c.l.b16 %v324
    %v347 = vunpack.c.l.b16 %v325
    %v348 = vpack.c.b16 %v341, %v340
    %v349 = vpack.c.b16 %v343, %v342
    %v350 = vpack.c.b16 %v345, %v344
    %v351 = vpack.c.b16 %v347, %v346
    %v353 = vsel %vm232, %v348, 0
    %v356 = vsel %vm232, %v349, 0
    %v359 = vsel %vm232, %v350, 0
    %v362 = vsel %vm232, %v351, 0
    %364 = vmatprep.subr.bf16.mxu0 0
    %365 = vmatpush1.bf16.msra.mxu0 %v326
    %366 = vmatprep.subr.bf16.mxu0 0
    %367 = vmatpush1.bf16.msra.mxu0 %v327
    %368 = vmatprep.subr.bf16.mxu0 0
    %369 = vmatpush1.bf16.msra.mxu0 %v328
    %370 = vmatprep.subr.bf16.mxu0 0
    %371 = vmatpush1.bf16.msra.mxu0 %v329
    %372 = vmatprep.subr.bf16.mxu0 0
    %373 = vmatpush1.bf16.msra.mxu0 0
    %374 = vmatprep.subr.bf16.mxu0 0
    %375 = vmatpush1.bf16.msra.mxu0 0
    %376 = vmatprep.subr.bf16.mxu0 0
    %377 = vmatpush1.bf16.msra.mxu0 0
    %378 = vmatprep.subr.bf16.mxu0 0
    %379 = vmatpush1.bf16.msra.mxu0 0
    %380 = vmatprep.subr.bf16.mxu0 0
    %381 = vmatpush1.bf16.msra.mxu0 0
    %382 = vmatprep.subr.bf16.mxu0 0
    %383 = vmatpush1.bf16.msra.mxu0 0
    %384 = vmatprep.subr.bf16.mxu0 0
    %385 = vmatpush1.bf16.msra.mxu0 0
    %386 = vmatprep.subr.bf16.mxu0 0
    %387 = vmatpush1.bf16.msra.mxu0 0
    %388 = vmatprep.subr.bf16.mxu0 0
    %389 = vmatpush1.bf16.msra.mxu0 0
    %390 = vmatprep.subr.bf16.mxu0 0
    %391 = vmatpush1.bf16.msra.mxu0 0
    %392 = vmatprep.subr.bf16.mxu0 0
    %393 = vmatpush1.bf16.msra.mxu0 0
    %394 = vmatprep.subr.bf16.mxu0 0
    %395 = vmatpush1.bf16.msra.mxu0 0
    %396 = vmatprep.mubr.bf16.mxu0 0
    %397 = vmatmul.mubr.bf16.gmra.mrb[0].mxu0 %v353
    %v398 = vpop.f32.mrb[0].mxu0
    %v399 = vadd.f32 %v331, %v398
    %v400 = vpop.f32.mrb[0].mxu0
    %v401 = vpop.f32.mrb[0].mxu0
    %v402 = vadd.f32 %v331, %v401
    %v403 = vpop.f32.mrb[0].mxu0
    %404 = vmatprep.mubr.bf16.mxu0 0
    %405 = vmatmul.mubr.bf16.gmra.mrb[0].mxu0 %v356
    %v406 = vpop.f32.mrb[0].mxu0
    %v407 = vadd.f32 %v331, %v406
    %v408 = vpop.f32.mrb[0].mxu0
    %v409 = vpop.f32.mrb[0].mxu0
    %v410 = vadd.f32 %v331, %v409
    %v411 = vpop.f32.mrb[0].mxu0
    %412 = vmatprep.mubr.bf16.mxu0 0
    %413 = vmatmul.mubr.bf16.gmra.mrb[0].mxu0 %v359
    %v414 = vpop.f32.mrb[0].mxu0
    %v415 = vadd.f32 %v331, %v414
    %v416 = vpop.f32.mrb[0].mxu0
    %v417 = vpop.f32.mrb[0].mxu0
    %v418 = vadd.f32 %v331, %v417
    %v419 = vpop.f32.mrb[0].mxu0
    %420 = vmatprep.mubr.bf16.mxu0 0
    %421 = vmatmul.mubr.bf16.gmra.mrb[0].mxu0 %v362
    %v422 = vpop.f32.mrb[0].mxu0
    %v423 = vadd.f32 %v331, %v422
    %v424 = vpop.f32.mrb[0].mxu0
    %v425 = vpop.f32.mrb[0].mxu0
    %v426 = vadd.f32 %v331, %v425
    %v427 = vpop.f32.mrb[0].mxu0
    %428 = vdwg.mxu0
    %v429 = vxor.u32 %v399, 2147483648
    %v430 = vxor.u32 %v402, 2147483648
    %v431 = vxor.u32 %v407, 2147483648
    %v432 = vxor.u32 %v410, 2147483648
    %v433 = vxor.u32 %v415, 2147483648
    %v434 = vxor.u32 %v418, 2147483648
    %v435 = vxor.u32 %v423, 2147483648
    %v436 = vxor.u32 %v426, 2147483648
    %v437 = vmul.f32 %v429, 1.442695
    %v438 = vpow.pop %v437
    %v439 = vmul.f32 %v430, 1.442695
    %v440 = vpow.pop %v439
    %v441 = vmul.f32 %v431, 1.442695
    %v442 = vpow.pop %v441
    %v443 = vmul.f32 %v432, 1.442695
    %v444 = vpow.pop %v443
    %v445 = vmul.f32 %v433, 1.442695
    %v446 = vpow.pop %v445
    %v447 = vmul.f32 %v434, 1.442695
    %v448 = vpow.pop %v447
    %v449 = vmul.f32 %v435, 1.442695
    %v450 = vpow.pop %v449
    %v451 = vmul.f32 %v436, 1.442695
    %v452 = vpow.pop %v451
    %v453 = vadd.f32 %v438, 1.0
    %v454 = vadd.f32 %v440, 1.0
    %v455 = vadd.f32 %v442, 1.0
    %v456 = vadd.f32 %v444, 1.0
    %v457 = vadd.f32 %v446, 1.0
    %v458 = vadd.f32 %v448, 1.0
    %v459 = vadd.f32 %v450, 1.0
    %v460 = vadd.f32 %v452, 1.0
    %v461 = vrcp.pop %v453
    %v462 = vmul.f32 1.0, %v461
    %v463 = vrcp.pop %v454
    %v464 = vmul.f32 1.0, %v463
    %v465 = vrcp.pop %v455
    %v466 = vmul.f32 1.0, %v465
    %v467 = vrcp.pop %v456
    %v468 = vmul.f32 1.0, %v467
    %v469 = vrcp.pop %v457
    %v470 = vmul.f32 1.0, %v469
    %v471 = vrcp.pop %v458
    %v472 = vmul.f32 1.0, %v471
    %v473 = vrcp.pop %v459
    %v474 = vmul.f32 1.0, %v473
    %v475 = vrcp.pop %v460
    %v476 = vmul.f32 1.0, %v475
    %v477 = vld [vmem:[%s5] sm:$0xf]
    %vm478 = vcmask 31744
    %v480 = vsel %vm478, %v462, 0
    %v483 = vsel %vm478, %v464, 0
    %v486 = vsel %vm478, %v466, 0
    %v489 = vsel %vm478, %v468, 0
    %v492 = vsel %vm478, %v470, 0
    %v495 = vsel %vm478, %v472, 0
    %v498 = vsel %vm478, %v474, 0
    %v501 = vsel %vm478, %v476, 0
    %vm503 = vcmask 1043456
    %v505 = vsel %vm503, %v477, 0
    %507 = vmatprep.subr.mxu0 0.0
    %508 = vmatpush1.msra.mxu0 %v505
    %509 = vmatprep.subr.mxu0 0.0
    %510 = vmatpush1.msra.mxu0 0.0
    %511 = vmatprep.subr.mxu0 0.0
    %512 = vmatpush1.msra.mxu0 0.0
    %513 = vmatprep.subr.mxu0 0.0
    %514 = vmatpush1.msra.mxu0 0.0
    %515 = vmatprep.subr.mxu0 0.0
    %516 = vmatpush1.msra.mxu0 0.0
    %517 = vmatprep.subr.mxu0 0.0
    %518 = vmatpush1.msra.mxu0 0.0
    %519 = vmatprep.subr.mxu0 0.0
    %520 = vmatpush1.msra.mxu0 0.0
    %521 = vmatprep.subr.mxu0 0.0
    %522 = vmatpush1.msra.mxu0 0.0
    %523 = vmatprep.subr.mxu0 0.0
    %524 = vmatpush1.msra.mxu0 0.0
    %525 = vmatprep.subr.mxu0 0.0
    %526 = vmatpush1.msra.mxu0 0.0
    %527 = vmatprep.subr.mxu0 0.0
    %528 = vmatpush1.msra.mxu0 0.0
    %529 = vmatprep.subr.mxu0 0.0
    %530 = vmatpush1.msra.mxu0 0.0
    %531 = vmatprep.subr.mxu0 0.0
    %532 = vmatpush1.msra.mxu0 0.0
    %533 = vmatprep.subr.mxu0 0.0
    %534 = vmatpush1.msra.mxu0 0.0
    %535 = vmatprep.subr.mxu0 0.0
    %536 = vmatpush1.msra.mxu0 0.0
    %537 = vmatprep.subr.mxu0 0.0
    %538 = vmatpush1.msra.mxu0 0.0
    %539 = vmatprep.subr.mxu0 0.0
    %540 = vmatpush1.msra.mxu0 0.0
    %541 = vmatprep.subr.mxu0 0.0
    %542 = vmatpush1.msra.mxu0 0.0
    %543 = vmatprep.subr.mxu0 0.0
    %544 = vmatpush1.msra.mxu0 0.0
    %545 = vmatprep.subr.mxu0 0.0
    %546 = vmatpush1.msra.mxu0 0.0
    %547 = vmatprep.subr.mxu0 0.0
    %548 = vmatpush1.msra.mxu0 0.0
    %549 = vmatprep.subr.mxu0 0.0
    %550 = vmatpush1.msra.mxu0 0.0
    %551 = vmatprep.subr.mxu0 0.0
    %552 = vmatpush1.msra.mxu0 0.0
    %553 = vmatprep.subr.mxu0 0.0
    %554 = vmatpush1.msra.mxu0 0.0
    %555 = vmatprep.subr.mxu0 0.0
    %556 = vmatpush1.msra.mxu0 0.0
    %557 = vmatprep.subr.mxu0 0.0
    %558 = vmatpush1.msra.mxu0 0.0
    %559 = vmatprep.subr.mxu0 0.0
    %560 = vmatpush1.msra.mxu0 0.0
    %561 = vmatprep.subr.mxu0 0.0
    %562 = vmatpush1.msra.mxu0 0.0
    %563 = vmatprep.subr.mxu0 0.0
    %564 = vmatpush1.msra.mxu0 0.0
    %565 = vmatprep.subr.mxu0 0.0
    %566 = vmatpush1.msra.mxu0 0.0
    %567 = vmatprep.subr.mxu0 0.0
    %568 = vmatpush1.msra.mxu0 0.0
    %569 = vmatprep.subr.mxu0 0.0
    %570 = vmatpush1.msra.mxu0 0.0
    %571 = vmatprep.mubr.f32.mxu0 0.0
    %572 = vmatmul.mubr.f32.gmra.mrb[0].mxu0 %v480
    %v573 = vpop.f32.mrb[0].mxu0
    %v574 = vadd.f32 0.0, %v573
    %v575 = vpop.f32.mrb[0].mxu0
    %576 = vmatprep.mubr.f32.mxu0 0.0
    %577 = vmatmul.mubr.f32.gmra.mrb[0].mxu0 %v483
    %v578 = vpop.f32.mrb[0].mxu0
    %v579 = vadd.f32 0.0, %v578
    %v580 = vpop.f32.mrb[0].mxu0
    %581 = vmatprep.mubr.f32.mxu0 0.0
    %582 = vmatmul.mubr.f32.gmra.mrb[0].mxu0 %v486
    %v583 = vpop.f32.mrb[0].mxu0
    %v584 = vadd.f32 0.0, %v583
    %v585 = vpop.f32.mrb[0].mxu0
    %586 = vmatprep.mubr.f32.mxu0 0.0
    %587 = vmatmul.mubr.f32.gmra.mrb[0].mxu0 %v489
    %v588 = vpop.f32.mrb[0].mxu0
    %v589 = vadd.f32 0.0, %v588
    %v590 = vpop.f32.mrb[0].mxu0
    %591 = vmatprep.mubr.f32.mxu0 0.0
    %592 = vmatmul.mubr.f32.gmra.mrb[0].mxu0 %v492
    %v593 = vpop.f32.mrb[0].mxu0
    %v594 = vadd.f32 0.0, %v593
    %v595 = vpop.f32.mrb[0].mxu0
    %596 = vmatprep.mubr.f32.mxu0 0.0
    %597 = vmatmul.mubr.f32.gmra.mrb[0].mxu0 %v495
    %v598 = vpop.f32.mrb[0].mxu0
    %v599 = vadd.f32 0.0, %v598
    %v600 = vpop.f32.mrb[0].mxu0
    %601 = vmatprep.mubr.f32.mxu0 0.0
    %602 = vmatmul.mubr.f32.gmra.mrb[0].mxu0 %v498
    %v603 = vpop.f32.mrb[0].mxu0
    %v604 = vadd.f32 0.0, %v603
    %v605 = vpop.f32.mrb[0].mxu0
    %606 = vmatprep.mubr.f32.mxu0 0.0
    %607 = vmatmul.mubr.f32.gmra.mrb[0].mxu0 %v501
    %v608 = vpop.f32.mrb[0].mxu0
    %v609 = vadd.f32 0.0, %v608
    %v610 = vpop.f32.mrb[0].mxu0
    %611 = vdwg.mxu0
    %v612 = vmul.f32 %v47, %v574
    %v613 = vmul.f32 %v48, %v579
    %v614 = vmul.f32 %v49, %v584
    %v615 = vmul.f32 %v50, %v589
    %v616 = vmul.f32 %v51, %v594
    %v617 = vmul.f32 %v52, %v599
    %v618 = vmul.f32 %v53, %v604
    %v619 = vmul.f32 %v54, %v609
    %620 = vst [vmem:[#allocation5] sm:$0xff] %v612
    %621 = vst [vmem:[#allocation5 + $0x8] sm:$0xff] %v613
    %622 = vst [vmem:[#allocation5 + $0x10] sm:$0xff] %v614
    %623 = vst [vmem:[#allocation5 + $0x18] sm:$0xff] %v615
    %624 = vst [vmem:[#allocation5 + $0x20] sm:$0xff] %v616
    %625 = vst [vmem:[#allocation5 + $0x28] sm:$0xff] %v617
    %626 = vst [vmem:[#allocation5 + $0x30] sm:$0xff] %v618
    %627 = vst [vmem:[#allocation5 + $0x38] sm:$0xff] %v619
    %v636 = vcombine.high %v612, %v612
    %v637 = vcombine.high %v613, %v613
    %v638 = vcombine.high %v614, %v614
    %v639 = vcombine.high %v615, %v615
    %v640 = vcombine.high %v616, %v616
    %v641 = vcombine.high %v617, %v617
    %v642 = vcombine.high %v618, %v618
    %v643 = vcombine.high %v619, %v619
    %v652 = vsel %vm503, %v612, -inf
    %v653 = vrot.slane %v652, 4
    %v654 = vmax.f32 %v652, %v653
    %v655 = vrot.slane %v654, 2
    %v656 = vmax.f32 %v654, %v655
    %v657 = vrot.slane %v656, 1
    %v658 = vmax.f32 %v656, %v657
    %v659 = vsel %vm503, %v636, -inf
    %v660 = vrot.slane %v659, 4
    %v661 = vmax.f32 %v659, %v660
    %v662 = vrot.slane %v661, 2
    %v663 = vmax.f32 %v661, %v662
    %v664 = vrot.slane %v663, 1
    %v665 = vmax.f32 %v663, %v664
    %v666 = vsel %vm503, %v613, -inf
    %v667 = vrot.slane %v666, 4
    %v668 = vmax.f32 %v666, %v667
    %v669 = vrot.slane %v668, 2
    %v670 = vmax.f32 %v668, %v669
    %v671 = vrot.slane %v670, 1
    %v672 = vmax.f32 %v670, %v671
    %v673 = vsel %vm503, %v637, -inf
    %v674 = vrot.slane %v673, 4
    %v675 = vmax.f32 %v673, %v674
    %v676 = vrot.slane %v675, 2
    %v677 = vmax.f32 %v675, %v676
    %v678 = vrot.slane %v677, 1
    %v679 = vmax.f32 %v677, %v678
    %v680 = vsel %vm503, %v614, -inf
    %v681 = vrot.slane %v680, 4
    %v682 = vmax.f32 %v680, %v681
    %v683 = vrot.slane %v682, 2
    %v684 = vmax.f32 %v682, %v683
    %v685 = vrot.slane %v684, 1
    %v686 = vmax.f32 %v684, %v685
    %v687 = vsel %vm503, %v638, -inf
    %v688 = vrot.slane %v687, 4
    %v689 = vmax.f32 %v687, %v688
    %v690 = vrot.slane %v689, 2
    %v691 = vmax.f32 %v689, %v690
    %v692 = vrot.slane %v691, 1
    %v693 = vmax.f32 %v691, %v692
    %v694 = vsel %vm503, %v615, -inf
    %v695 = vrot.slane %v694, 4
    %v696 = vmax.f32 %v694, %v695
    %v697 = vrot.slane %v696, 2
    %v698 = vmax.f32 %v696, %v697
    %v699 = vrot.slane %v698, 1
    %v700 = vmax.f32 %v698, %v699
    %v701 = vsel %vm503, %v639, -inf
    %v702 = vrot.slane %v701, 4
    %v703 = vmax.f32 %v701, %v702
    %v704 = vrot.slane %v703, 2
    %v705 = vmax.f32 %v703, %v704
    %v706 = vrot.slane %v705, 1
    %v707 = vmax.f32 %v705, %v706
    %v708 = vsel %vm503, %v616, -inf
    %v709 = vrot.slane %v708, 4
    %v710 = vmax.f32 %v708, %v709
    %v711 = vrot.slane %v710, 2
    %v712 = vmax.f32 %v710, %v711
    %v713 = vrot.slane %v712, 1
    %v714 = vmax.f32 %v712, %v713
    %v715 = vsel %vm503, %v640, -inf
    %v716 = vrot.slane %v715, 4
    %v717 = vmax.f32 %v715, %v716
    %v718 = vrot.slane %v717, 2
    %v719 = vmax.f32 %v717, %v718
    %v720 = vrot.slane %v719, 1
    %v721 = vmax.f32 %v719, %v720
    %v722 = vsel %vm503, %v617, -inf
    %v723 = vrot.slane %v722, 4
    %v724 = vmax.f32 %v722, %v723
    %v725 = vrot.slane %v724, 2
    %v726 = vmax.f32 %v724, %v725
    %v727 = vrot.slane %v726, 1
    %v728 = vmax.f32 %v726, %v727
    %v729 = vsel %vm503, %v641, -inf
    %v730 = vrot.slane %v729, 4
    %v731 = vmax.f32 %v729, %v730
    %v732 = vrot.slane %v731, 2
    %v733 = vmax.f32 %v731, %v732
    %v734 = vrot.slane %v733, 1
    %v735 = vmax.f32 %v733, %v734
    %v736 = vsel %vm503, %v618, -inf
    %v737 = vrot.slane %v736, 4
    %v738 = vmax.f32 %v736, %v737
    %v739 = vrot.slane %v738, 2
    %v740 = vmax.f32 %v738, %v739
    %v741 = vrot.slane %v740, 1
    %v742 = vmax.f32 %v740, %v741
    %v743 = vsel %vm503, %v642, -inf
    %v744 = vrot.slane %v743, 4
    %v745 = vmax.f32 %v743, %v744
    %v746 = vrot.slane %v745, 2
    %v747 = vmax.f32 %v745, %v746
    %v748 = vrot.slane %v747, 1
    %v749 = vmax.f32 %v747, %v748
    %v750 = vsel %vm503, %v619, -inf
    %v751 = vrot.slane %v750, 4
    %v752 = vmax.f32 %v750, %v751
    %v753 = vrot.slane %v752, 2
    %v754 = vmax.f32 %v752, %v753
    %v755 = vrot.slane %v754, 1
    %v756 = vmax.f32 %v754, %v755
    %v757 = vsel %vm503, %v643, -inf
    %v758 = vrot.slane %v757, 4
    %v759 = vmax.f32 %v757, %v758
    %v760 = vrot.slane %v759, 2
    %v761 = vmax.f32 %v759, %v760
    %v762 = vrot.slane %v761, 1
    %v763 = vmax.f32 %v761, %v762
    %v764 = vmax.f32 %v658, %v672
    %v765 = vmax.f32 %v764, %v686
    %v766 = vmax.f32 %v765, %v700
    %v767 = vmax.f32 %v665, %v679
    %v768 = vmax.f32 %v767, %v693
    %v769 = vmax.f32 %v768, %v707
    %v770 = vmax.f32 %v714, %v728
    %v771 = vmax.f32 %v770, %v742
    %v772 = vmax.f32 %v771, %v756
    %v773 = vmax.f32 %v721, %v735
    %v774 = vmax.f32 %v773, %v749
    %v775 = vmax.f32 %v774, %v763
    %v776 = vld [vmem:[%s6] sm:$0xff]
    %v777 = vld [vmem:[%s6 + $0x8] sm:$0xff]
    %v778 = vld [vmem:[%s6 + $0x10] sm:$0xff]
    %v779 = vld [vmem:[%s6 + $0x18] sm:$0xff]
    %v780 = vld [vmem:[%s6 + $0x20] sm:$0xff]
    %v781 = vld [vmem:[%s6 + $0x28] sm:$0xff]
    %v782 = vld [vmem:[%s6 + $0x30] sm:$0xff]
    %v783 = vld [vmem:[%s6 + $0x38] sm:$0xff]
    %v784 = vld [vmem:[%s6 + $0x40] sm:$0xff]
    %v785 = vld [vmem:[%s6 + $0x48] sm:$0xff]
    %v786 = vld [vmem:[%s6 + $0x50] sm:$0xff]
    %v787 = vld [vmem:[%s6 + $0x58] sm:$0xff]
    %v788 = vld [vmem:[%s6 + $0x60] sm:$0xff]
    %v789 = vld [vmem:[%s6 + $0x68] sm:$0xff]
    %v790 = vld [vmem:[%s6 + $0x70] sm:$0xff]
    %v791 = vld [vmem:[%s6 + $0x78] sm:$0xff]
    %v792 = vld [vmem:[%s6 + $0x80] sm:$0xff]
    %v793 = vld [vmem:[%s6 + $0x88] sm:$0xff]
    %v794 = vld [vmem:[%s6 + $0x90] sm:$0xff]
    %v795 = vld [vmem:[%s6 + $0x98] sm:$0xff]
    %v796 = vld [vmem:[%s6 + $0xa0] sm:$0xff]
    %v797 = vld [vmem:[%s6 + $0xa8] sm:$0xff]
    %v798 = vld [vmem:[%s6 + $0xb0] sm:$0xff]
    %v799 = vld [vmem:[%s6 + $0xb8] sm:$0xff]
    %v800 = vld [vmem:[%s6 + $0xc0] sm:$0xff]
    %v801 = vld [vmem:[%s6 + $0xc8] sm:$0xff]
    %v802 = vld [vmem:[%s6 + $0xd0] sm:$0xff]
    %v803 = vld [vmem:[%s6 + $0xd8] sm:$0xff]
    %v804 = vld [vmem:[%s6 + $0xe0] sm:$0xff]
    %v805 = vld [vmem:[%s6 + $0xe8] sm:$0xff]
    %v806 = vld [vmem:[%s6 + $0xf0] sm:$0xff]
    %v807 = vld [vmem:[%s6 + $0xf8] sm:$0xff]
    %v808 = vld [vmem:[%s6 + $0x100] sm:$0xff]
    %v809 = vld [vmem:[%s6 + $0x108] sm:$0xff]
    %v810 = vld [vmem:[%s6 + $0x110] sm:$0xff]
    %v811 = vld [vmem:[%s6 + $0x118] sm:$0xff]
    %v812 = vld [vmem:[%s6 + $0x120] sm:$0xff]
    %v813 = vld [vmem:[%s6 + $0x128] sm:$0xff]
    %v814 = vld [vmem:[%s6 + $0x130] sm:$0xff]
    %v815 = vld [vmem:[%s6 + $0x138] sm:$0xff]
    %v816 = vld [vmem:[%s6 + $0x140] sm:$0xff]
    %v817 = vld [vmem:[%s6 + $0x148] sm:$0xff]
    %v818 = vld [vmem:[%s6 + $0x150] sm:$0xff]
    %v819 = vld [vmem:[%s6 + $0x158] sm:$0xff]
    %v820 = vld [vmem:[%s6 + $0x160] sm:$0xff]
    %v821 = vld [vmem:[%s6 + $0x168] sm:$0xff]
    %v822 = vld [vmem:[%s6 + $0x170] sm:$0xff]
    %v823 = vld [vmem:[%s6 + $0x178] sm:$0xff]
    %v824 = vld [vmem:[%s6 + $0x180] sm:$0xff]
    %v825 = vld [vmem:[%s6 + $0x188] sm:$0xff]
    %v826 = vld [vmem:[%s6 + $0x190] sm:$0xff]
    %v827 = vld [vmem:[%s6 + $0x198] sm:$0xff]
    %v828 = vld [vmem:[%s6 + $0x1a0] sm:$0xff]
    %v829 = vld [vmem:[%s6 + $0x1a8] sm:$0xff]
    %v830 = vld [vmem:[%s6 + $0x1b0] sm:$0xff]
    %v831 = vld [vmem:[%s6 + $0x1b8] sm:$0xff]
    %v832 = vld [vmem:[%s6 + $0x1c0] sm:$0xff]
    %v833 = vld [vmem:[%s6 + $0x1c8] sm:$0xff]
    %v834 = vld [vmem:[%s6 + $0x1d0] sm:$0xff]
    %v835 = vld [vmem:[%s6 + $0x1d8] sm:$0xff]
    %v836 = vld [vmem:[%s6 + $0x1e0] sm:$0xff]
    %v837 = vld [vmem:[%s6 + $0x1e8] sm:$0xff]
    %v838 = vld [vmem:[%s6 + $0x1f0] sm:$0xff]
    %v839 = vld [vmem:[%s6 + $0x1f8] sm:$0xff]
    %v840 = vld [vmem:[%s7] sm:$0x1]
    %841 = vmatprep.subr.mxu0 0.0
    %842 = vmatpush1.msra.mxu0 %v776
    %843 = vmatprep.subr.mxu0 0.0
    %844 = vmatpush1.msra.mxu0 %v777
    %845 = vmatprep.subr.mxu0 0.0
    %846 = vmatpush1.msra.mxu0 %v778
    %847 = vmatprep.subr.mxu0 0.0
    %848 = vmatpush1.msra.mxu0 %v779
    %849 = vmatprep.subr.mxu0 0.0
    %850 = vmatpush1.msra.mxu0 %v780
    %851 = vmatprep.subr.mxu0 0.0
    %852 = vmatpush1.msra.mxu0 %v781
    %853 = vmatprep.subr.mxu0 0.0
    %854 = vmatpush1.msra.mxu0 %v782
    %855 = vmatprep.subr.mxu0 0.0
    %856 = vmatpush1.msra.mxu0 %v783
    %857 = vmatprep.subr.mxu0 0.0
    %858 = vmatpush1.msra.mxu0 %v784
    %859 = vmatprep.subr.mxu0 0.0
    %860 = vmatpush1.msra.mxu0 %v785
    %861 = vmatprep.subr.mxu0 0.0
    %862 = vmatpush1.msra.mxu0 %v786
    %863 = vmatprep.subr.mxu0 0.0
    %864 = vmatpush1.msra.mxu0 %v787
    %865 = vmatprep.subr.mxu0 0.0
    %866 = vmatpush1.msra.mxu0 %v788
    %867 = vmatprep.subr.mxu0 0.0
    %868 = vmatpush1.msra.mxu0 %v789
    %869 = vmatprep.subr.mxu0 0.0
    %870 = vmatpush1.msra.mxu0 %v790
    %871 = vmatprep.subr.mxu0 0.0
    %872 = vmatpush1.msra.mxu0 %v791
    %873 = vmatprep.subr.mxu0 0.0
    %874 = vmatpush1.msra.mxu0 %v792
    %875 = vmatprep.subr.mxu0 0.0
    %876 = vmatpush1.msra.mxu0 %v793
    %877 = vmatprep.subr.mxu0 0.0
    %878 = vmatpush1.msra.mxu0 %v794
    %879 = vmatprep.subr.mxu0 0.0
    %880 = vmatpush1.msra.mxu0 %v795
    %881 = vmatprep.subr.mxu0 0.0
    %882 = vmatpush1.msra.mxu0 %v796
    %883 = vmatprep.subr.mxu0 0.0
    %884 = vmatpush1.msra.mxu0 %v797
    %885 = vmatprep.subr.mxu0 0.0
    %886 = vmatpush1.msra.mxu0 %v798
    %887 = vmatprep.subr.mxu0 0.0
    %888 = vmatpush1.msra.mxu0 %v799
    %889 = vmatprep.subr.mxu0 0.0
    %890 = vmatpush1.msra.mxu0 %v800
    %891 = vmatprep.subr.mxu0 0.0
    %892 = vmatpush1.msra.mxu0 %v801
    %893 = vmatprep.subr.mxu0 0.0
    %894 = vmatpush1.msra.mxu0 %v802
    %895 = vmatprep.subr.mxu0 0.0
    %896 = vmatpush1.msra.mxu0 %v803
    %897 = vmatprep.subr.mxu0 0.0
    %898 = vmatpush1.msra.mxu0 %v804
    %899 = vmatprep.subr.mxu0 0.0
    %900 = vmatpush1.msra.mxu0 %v805
    %901 = vmatprep.subr.mxu0 0.0
    %902 = vmatpush1.msra.mxu0 %v806
    %903 = vmatprep.subr.mxu0 0.0
    %904 = vmatpush1.msra.mxu0 %v807
    %905 = vmatprep.mubr.f32.mxu0 %v769
    %906 = vmatmul.mubr.f32.gmra.mrb[0].mxu0 %v766
    %v907 = vpop.f32.mrb[0].mxu0
    %v908 = vadd.f32 %v840, %v907
    %v909 = vpop.f32.mrb[0].mxu0
    %910 = vdwg.mxu0
    %911 = vmatprep.subr.mxu0 0.0
    %912 = vmatpush1.msra.mxu0 %v808
    %913 = vmatprep.subr.mxu0 0.0
    %914 = vmatpush1.msra.mxu0 %v809
    %915 = vmatprep.subr.mxu0 0.0
    %916 = vmatpush1.msra.mxu0 %v810
    %917 = vmatprep.subr.mxu0 0.0
    %918 = vmatpush1.msra.mxu0 %v811
    %919 = vmatprep.subr.mxu0 0.0
    %920 = vmatpush1.msra.mxu0 %v812
    %921 = vmatprep.subr.mxu0 0.0
    %922 = vmatpush1.msra.mxu0 %v813
    %923 = vmatprep.subr.mxu0 0.0
    %924 = vmatpush1.msra.mxu0 %v814
    %925 = vmatprep.subr.mxu0 0.0
    %926 = vmatpush1.msra.mxu0 %v815
    %927 = vmatprep.subr.mxu0 0.0
    %928 = vmatpush1.msra.mxu0 %v816
    %929 = vmatprep.subr.mxu0 0.0
    %930 = vmatpush1.msra.mxu0 %v817
    %931 = vmatprep.subr.mxu0 0.0
    %932 = vmatpush1.msra.mxu0 %v818
    %933 = vmatprep.subr.mxu0 0.0
    %934 = vmatpush1.msra.mxu0 %v819
    %935 = vmatprep.subr.mxu0 0.0
    %936 = vmatpush1.msra.mxu0 %v820
    %937 = vmatprep.subr.mxu0 0.0
    %938 = vmatpush1.msra.mxu0 %v821
    %939 = vmatprep.subr.mxu0 0.0
    %940 = vmatpush1.msra.mxu0 %v822
    %941 = vmatprep.subr.mxu0 0.0
    %942 = vmatpush1.msra.mxu0 %v823
    %943 = vmatprep.subr.mxu0 0.0
    %944 = vmatpush1.msra.mxu0 %v824
    %945 = vmatprep.subr.mxu0 0.0
    %946 = vmatpush1.msra.mxu0 %v825
    %947 = vmatprep.subr.mxu0 0.0
    %948 = vmatpush1.msra.mxu0 %v826
    %949 = vmatprep.subr.mxu0 0.0
    %950 = vmatpush1.msra.mxu0 %v827
    %951 = vmatprep.subr.mxu0 0.0
    %952 = vmatpush1.msra.mxu0 %v828
    %953 = vmatprep.subr.mxu0 0.0
    %954 = vmatpush1.msra.mxu0 %v829
    %955 = vmatprep.subr.mxu0 0.0
    %956 = vmatpush1.msra.mxu0 %v830
    %957 = vmatprep.subr.mxu0 0.0
    %958 = vmatpush1.msra.mxu0 %v831
    %959 = vmatprep.subr.mxu0 0.0
    %960 = vmatpush1.msra.mxu0 %v832
    %961 = vmatprep.subr.mxu0 0.0
    %962 = vmatpush1.msra.mxu0 %v833
    %963 = vmatprep.subr.mxu0 0.0
    %964 = vmatpush1.msra.mxu0 %v834
    %965 = vmatprep.subr.mxu0 0.0
    %966 = vmatpush1.msra.mxu0 %v835
    %967 = vmatprep.subr.mxu0 0.0
    %968 = vmatpush1.msra.mxu0 %v836
    %969 = vmatprep.subr.mxu0 0.0
    %970 = vmatpush1.msra.mxu0 %v837
    %971 = vmatprep.subr.mxu0 0.0
    %972 = vmatpush1.msra.mxu0 %v838
    %973 = vmatprep.subr.mxu0 0.0
    %974 = vmatpush1.msra.mxu0 %v839
    %975 = vmatprep.mubr.f32.mxu0 %v775
    %976 = vmatmul.mubr.f32.gmra.mrb[0].mxu0 %v772
    %v977 = vpop.f32.mrb[0].mxu0
    %v978 = vadd.f32 %v908, %v977
    %v979 = vpop.f32.mrb[0].mxu0
    %980 = vdwg.mxu0
    %vm981 = vcmask 122880
    %982 = vst.msk [vmem:[#allocation6] sm:$0x1] %vm981, %v978
    // Predicated region
    $region38: #{tpu_custom_call.1} parent=1 // pred_check
      _
    $region39: #{tpu_custom_call.1} parent=1 // pred_check_branch
      %984 = sbr.rel (0) target = $region41
    $region40: #{tpu_custom_call.1} parent=1 // pred_region
      %s986 = ssub.s32 1024, 1024
      %987 = vsyncadd [#allocation3], %s986
      %s988 = sshll.u32 [#allocation5], 4
      %s989 = int_to_ptr.vmem [resolvable:$true] %s988
      %994 = dma.vmem_to_hbm [thread:$0]  %s989, 1024, %s8, [#allocation3], 128, 128, 8
    $region41: #{tpu_custom_call.1} parent=1 // pred_fallthru
      _
    // Predicated region
    $region42: #{tpu_custom_call.1} parent=1 // pred_check
      _
    $region43: #{tpu_custom_call.1} parent=1 // pred_check_branch
      %996 = sbr.rel (0) target = $region45
    $region44: #{tpu_custom_call.1} parent=1 // pred_region
      %s998 = ssub.s32 16, 16
      %999 = vsyncadd [#allocation7], %s998
      %s1001 = sshll.u32 [#allocation6], 4
      %s1002 = int_to_ptr.vmem [resolvable:$true] %s1001
      %1004 = dma.vmem_to_hbm [thread:$0]  %s1002, 16, %s9, [#allocation7]
    $region45: #{tpu_custom_call.1} parent=1 // pred_fallthru
      _
    // Predicated region
    $region46: #{tpu_custom_call.1} parent=1 // pred_check
      _
    $region47: #{tpu_custom_call.1} parent=1 // pred_check_branch
      %1006 = sbr.rel (0) target = $region49
    $region48: #{tpu_custom_call.1} parent=1 // pred_region
      %1007 = dma.done [#allocation3], 1024
    $region49: #{tpu_custom_call.1} parent=1 // pred_fallthru
      _
    // Predicated region
    $region50: #{tpu_custom_call.1} parent=1 // pred_check
      _
    $region51: #{tpu_custom_call.1} parent=1 // pred_check_branch
      %1009 = sbr.rel (0) target = $region53
    $region52: #{tpu_custom_call.1} parent=1 // pred_region
      %1010 = dma.done [#allocation7], 16
    $region53: #{tpu_custom_call.1} parent=1 // pred_fallthru
      _
    %1011 = vsyncpa [#allocation3], 1
    %1012 = vsyncpa [#allocation7], 1
    %1013 = vsyncpa [#allocation4], 1

</llo_original>
